<compile_context>
chip_gen: v5e
topology: v5e:2x2
jax: 0.10.0
libtpu: 0.0.40
codegen_flags: <defaults>
</compile_context>

<pallas_src>
import numpy as np

import jax
import jax.numpy as jnp
from jax.experimental import pallas as pl
from jax.experimental.pallas import tpu as pltpu


# ----------------------------------------------------------------------------
# Wrapper-side glue: separable bilinear interpolation weights (plain XLA).
# ----------------------------------------------------------------------------
def _axis_interp_weights(start, bin_size, out_size, sample_num, dim_size):
    """Separable bilinear weights along one axis, summed over sample points.

    Matches the alphapose/mmdet-v1 roi_align CUDA `bilinear_interpolate`:
      y = roi_start + p*bin + (iy+0.5)*bin/sample_num
      out-of-range (y < -1 or y > dim) samples contribute 0;
      y <= 0 clamped to 0; y_low >= dim-1 clamps to the last pixel.
    Returns float32 array of shape (R, out_size, dim_size).
    """
    p = jnp.arange(out_size, dtype=jnp.float32)                          # (P,)
    s = (jnp.arange(sample_num, dtype=jnp.float32) + 0.5) / sample_num   # (S,)
    y = start[:, None, None] + (p[None, :, None] + s[None, None, :]) * bin_size[:, None, None]
    valid = (y >= -1.0) & (y <= float(dim_size))                         # (R,P,S)
    yc = jnp.maximum(y, 0.0)
    y_low = jnp.floor(yc)
    at_edge = y_low >= float(dim_size - 1)
    y_low = jnp.where(at_edge, float(dim_size - 1), y_low)
    y_high = jnp.where(at_edge, float(dim_size - 1), y_low + 1.0)
    ly = jnp.where(at_edge, 0.0, yc - y_low)
    hy = 1.0 - ly
    idx = jnp.arange(dim_size, dtype=jnp.float32)                        # (D,)
    w = (hy[..., None] * (idx == y_low[..., None]).astype(jnp.float32)
         + ly[..., None] * (idx == y_high[..., None]).astype(jnp.float32))
    w = jnp.where(valid[..., None], w, 0.0)                              # (R,P,S,D)
    return jnp.sum(w, axis=2)                                            # (R,P,D)


def _fused_interp_weights(rois, out_h, out_w, H, W, spatial_scale, sample_num):
    """Per-ROI fused weights Wfull: (R, out_h*out_w, H*W), with 1/S^2 folded in."""
    roi_start_w = rois[:, 1] * spatial_scale
    roi_start_h = rois[:, 2] * spatial_scale
    roi_end_w = (rois[:, 3] + 1.0) * spatial_scale
    roi_end_h = (rois[:, 4] + 1.0) * spatial_scale
    roi_w = jnp.maximum(roi_end_w - roi_start_w, 0.0)
    roi_h = jnp.maximum(roi_end_h - roi_start_h, 0.0)
    bin_h = roi_h / out_h
    bin_w = roi_w / out_w
    wy = _axis_interp_weights(roi_start_h, bin_h, out_h, sample_num, H)  # (R,out_h,H)
    wx = _axis_interp_weights(roi_start_w, bin_w, out_w, sample_num, W)  # (R,out_w,W)
    wy = wy * (1.0 / float(sample_num * sample_num))                     # fold 1/S^2
    R = rois.shape[0]
    wfull = (wy[:, :, None, :, None] * wx[:, None, :, None, :]).reshape(
        R, out_h * out_w, H * W)
    return wfull.astype(jnp.float32)


# ----------------------------------------------------------------------------
# Pallas kernel: one MXU matmul per (channel-tile, ROI-group).
# ----------------------------------------------------------------------------
def _roi_align_kernel(bid_ref, w_ref, feat_ref, out_ref):
    # bid_ref:  (n_groups,) scalar-prefetched per-group batch ids (index_map only)
    # w_ref:    (1, G*P, HW)  fused interpolation weights for this ROI group
    # feat_ref: (1, HW, tc)   feature plane of this group's image, channel tile
    # out_ref:  (1, G*P, tc)  lane-dense output tile
    del bid_ref
    out_ref[0] = jnp.dot(
        w_ref[0], feat_ref[0], preferred_element_type=jnp.float32
    ).astype(out_ref.dtype)


def _round_up(x, m):
    return ((x + m - 1) // m) * m


def _vmem_capacity_bytes():
    """Generation-aware VMEM capacity; conservative (v7x) fallback."""
    try:
        return int(pltpu.get_tpu_info().vmem_capacity_bytes)
    except Exception:
        return 64 * 1024 * 1024


def _pick_channel_tile(c_pad, hw, gp, w_bytes, f_bytes, o_bytes, budget):
    """Largest channel tile (multiple of 128, divides c_pad) whose
    double-buffered working set fits `budget` bytes."""
    tc = c_pad
    while tc >= 128:
        if c_pad % tc == 0:
            need = 2 * (gp * hw * w_bytes + hw * tc * f_bytes + gp * tc * o_bytes)
            if need <= budget:
                return tc
        tc -= 128
    return 128


def roi_align(features, rois, out_size, spatial_scale=1.0, sample_num=0,
              roi_group=8, compute_dtype=jnp.bfloat16):
    if isinstance(out_size, (tuple, list)):
        out_h, out_w = int(out_size[0]), int(out_size[1])
    else:
        out_h = out_w = int(out_size)
    if sample_num <= 0:
        # TODO(synk): sample_num == 0 (adaptive ceil(roi_size/out_size) sampling)
        # needs data-dependent per-ROI sample counts; only fixed sample_num > 0.
        raise NotImplementedError("sample_num must be > 0 for the Pallas kernel")

    N, C, H, W = features.shape
    R = rois.shape[0]
    P, HW = out_h * out_w, H * W
    G = max(1, min(int(roi_group), R))

    # --- sort ROIs by image and pad each image's run to a multiple of G -------
    bidx = jnp.clip(rois[:, 0].astype(jnp.int32), 0, N - 1)   # guard OOB batch ids
    order = jnp.argsort(bidx)
    b_sorted = bidx[order]
    rois_sorted = rois[order].astype(jnp.float32)

    counts = jnp.zeros((N,), jnp.int32).at[bidx].add(1)
    padded_counts = ((counts + G - 1) // G) * G
    group_base = jnp.concatenate(
        [jnp.zeros((1,), jnp.int32), jnp.cumsum(padded_counts)[:-1].astype(jnp.int32)])
    roi_start = jnp.concatenate(
        [jnp.zeros((1,), jnp.int32), jnp.cumsum(counts)[:-1].astype(jnp.int32)])
    pos = jnp.arange(R, dtype=jnp.int32)
    slot_sorted = group_base[b_sorted] + (pos - roi_start[b_sorted])

    R_pad = _round_up(R + N * (G - 1), G)       # static worst-case padded length
    n_groups = R_pad // G
    GP = G * P

    rois_padded = jnp.zeros((R_pad, 5), jnp.float32).at[slot_sorted].set(rois_sorted)
    b_padded = jnp.zeros((R_pad,), jnp.int32).at[slot_sorted].set(b_sorted)
    group_bid = b_padded[0::G]                  # first slot of every used group is real
    slot_of_roi = jnp.zeros((R,), jnp.int32).at[order].set(slot_sorted)

    # --- fused interpolation weights, bf16 stream, grouped ---------------------
    wfull = _fused_interp_weights(rois_padded, out_h, out_w, H, W,
                                  float(spatial_scale), int(sample_num))
    wfull = wfull.astype(compute_dtype).reshape(n_groups, GP, HW)

    # --- features: channels on the lane axis, padded to a multiple of 128 ------
    C_pad = max(_round_up(C, 128), 128)
    feat = jnp.transpose(features.reshape(N, C, HW), (0, 2, 1))
    if C_pad != C:
        feat = jnp.pad(feat, ((0, 0), (0, 0), (0, C_pad - C)))
    feat = feat.astype(compute_dtype)

    # --- channel tile / VMEM budget (generation aware) -------------------------
    in_bytes = jnp.dtype(compute_dtype).itemsize
    out_bytes = jnp.dtype(features.dtype).itemsize
    vmem_cap = _vmem_capacity_bytes()
    tc = _pick_channel_tile(C_pad, HW, GP, in_bytes, in_bytes, out_bytes,
                            budget=vmem_cap // 2)
    c_blocks = C_pad // tc
    vmem_need = 2 * (GP * HW * in_bytes + HW * tc * in_bytes + GP * tc * out_bytes) \
        + (4 << 20)
    vmem_limit = int(min(max(vmem_need, 32 << 20), vmem_cap))

    grid_spec = pltpu.PrefetchScalarGridSpec(
        num_scalar_prefetch=1,                  # per-group batch ids in SMEM
        grid=(c_blocks, n_groups),              # group axis innermost -> feat reuse
        in_specs=[
            pl.BlockSpec((1, GP, HW), lambda cb, g, bid: (g, 0, 0)),
            pl.BlockSpec((1, HW, tc), lambda cb, g, bid: (bid[g], 0, cb)),
        ],
        out_specs=pl.BlockSpec((1, GP, tc), lambda cb, g, bid: (g, 0, cb)),
    )

    out_padded = pl.pallas_call(
        _roi_align_kernel,
        out_shape=jax.ShapeDtypeStruct((n_groups, GP, C_pad), features.dtype),
        grid_spec=grid_spec,
        compiler_params=pltpu.CompilerParams(
            dimension_semantics=("parallel", "parallel"),
            vmem_limit_bytes=vmem_limit,
        ),
    )(group_bid, wfull, feat)

    # --- un-pad / un-sort / restore (R, C, out_h, out_w) ------------------------
    out = out_padded.reshape(R_pad, P, C_pad)[slot_of_roi, :, :C]
    return jnp.transpose(out, (0, 2, 1)).reshape(R, C, out_h, out_w)


# ----------------------------------------------------------------------------
# Independent reference: direct NumPy transcription of the CUDA kernel.
# ----------------------------------------------------------------------------
def _bilinear_np(feat_chw, y, x, H, W):
    if y < -1.0 or y > H or x < -1.0 or x > W:
        return np.zeros(feat_chw.shape[0], np.float32)
    y = max(y, 0.0)
    x = max(x, 0.0)
    y_low, x_low = int(y), int(x)
    if y_low >= H - 1:
        y_high = y_low = H - 1
        y = float(y_low)
    else:
        y_high = y_low + 1
    if x_low >= W - 1:
        x_high = x_low = W - 1
        x = float(x_low)
    else:
        x_high = x_low + 1
    ly, lx = y - y_low, x - x_low
    hy, hx = 1.0 - ly, 1.0 - lx
    return (hy * hx * feat_chw[:, y_low, x_low] + hy * lx * feat_chw[:, y_low, x_high]
            + ly * hx * feat_chw[:, y_high, x_low] + ly * lx * feat_chw[:, y_high, x_high])


def roi_align_direct_ref(features, rois, out_size, spatial_scale=1.0, sample_num=2):
    """Straight NumPy transcription of the alphapose / mmdet-v1 roi_align CUDA op."""
    if isinstance(out_size, (tuple, list)):
        out_h, out_w = int(out_size[0]), int(out_size[1])
    else:
        out_h = out_w = int(out_size)
    feats = np.asarray(features, dtype=np.float32)
    rois_np = np.asarray(rois, dtype=np.float32)
    _, C, H, W = feats.shape
    R = rois_np.shape[0]
    out = np.zeros((R, C, out_h, out_w), np.float32)
    for r in range(R):
        b = int(rois_np[r, 0])
        rsw = rois_np[r, 1] * spatial_scale
        rsh = rois_np[r, 2] * spatial_scale
        rew = (rois_np[r, 3] + 1.0) * spatial_scale
        reh = (rois_np[r, 4] + 1.0) * spatial_scale
        roi_w = max(rew - rsw, 0.0)
        roi_h = max(reh - rsh, 0.0)
        bin_h = roi_h / out_h
        bin_w = roi_w / out_w
        for ph in range(out_h):
            for pw in range(out_w):
                acc = np.zeros((C,), np.float32)
                for iy in range(sample_num):
                    y = rsh + ph * bin_h + (iy + 0.5) * bin_h / sample_num
                    for ix in range(sample_num):
                        x = rsw + pw * bin_w + (ix + 0.5) * bin_w / sample_num
                        acc += _bilinear_np(feats[b], y, x, H, W)
                out[r, :, ph, pw] = acc / float(sample_num * sample_num)
    return out


class RoIAlign:
    """JAX/Pallas counterpart of alphapose RoIAlign (forward only)."""

    def __init__(self, out_size, spatial_scale=1.0, sample_num=0, use_torchvision=False):
        self.out_size = out_size
        self.spatial_scale = float(spatial_scale)
        self.sample_num = int(sample_num)
        self.use_torchvision = use_torchvision  # unused: single Pallas path

    def __call__(self, features, rois):
        return roi_align(features, rois, self.out_size, self.spatial_scale, self.sample_num)

    def __repr__(self):
        return ("{}(out_size={}, spatial_scale={}, sample_num={}, use_torchvision={})"
                .format(self.__class__.__name__, self.out_size, self.spatial_scale,
                        self.sample_num, self.use_torchvision))


if __name__ == "__main__":
    key = jax.random.PRNGKey(0)
    N, C, H, W = 2, 4, 16, 16
    features = jax.random.normal(key, (N, C, H, W), dtype=jnp.float32)

    # rois: (batch_idx, x1, y1, x2, y2) in input coordinates.
    # Batch indices intentionally unsorted to exercise the sort/group/unsort path.
    rois = jnp.array(
        [
            [1.0, 3.5, 2.5, 12.0, 9.0],
            [0.0, 1.0, 1.0, 10.0, 12.0],
            [1.0, 5.0, 6.0, 7.0, 8.0],
            [0.0, 0.0, 0.0, 15.0, 15.0],
        ],
        dtype=jnp.float32,
    )

    module = RoIAlign(out_size=7, spatial_scale=0.5, sample_num=2)
    out = module(features, rois)
    out = jax.block_until_ready(out)

    ref = roi_align_direct_ref(np.asarray(features), np.asarray(rois),
                               out_size=7, spatial_scale=0.5, sample_num=2)

    assert out.shape == (rois.shape[0], C, 7, 7)
    # bf16 weight/feature streams with f32 accumulation -> loosened tolerance
    # vs the f32 NumPy reference (expected error ~1e-2 for unit-scale features).
    assert np.allclose(np.asarray(out), ref, atol=5e-2, rtol=5e-2), \
        "Pallas RoIAlign mismatch vs direct reference"

    print("KERNEL_OK")
</pallas_src>

<mosaic_0001>
module attributes {stable_mosaic.version = 11 : i64} {
  func.func @_roi_align_kernel(%arg0: i32, %arg1: i32, %arg2: memref<3xi32, #tpu.memory_space<smem>>, %arg3: memref<1x196x256xbf16, #tpu.memory_space<vmem>>, %arg4: memref<1x256x128xbf16, #tpu.memory_space<vmem>>, %arg5: memref<1x196x128xf32, #tpu.memory_space<vmem>>) attributes {dimension_semantics = [#tpu.dimension_semantics<parallel>, #tpu.dimension_semantics<parallel>], iteration_bounds = array<i64: 1, 3>, scalar_prefetch = 1 : i64, scratch_operands = 0 : i64, tpu.core_type = #tpu.core_type<tc>, window_params = [{transform_indices = @transform_0, window_bounds = array<i64: 1, 196, 256>}, {transform_indices = @transform_1, window_bounds = array<i64: 1, 256, 128>}, {transform_indices = @transform_2, window_bounds = array<i64: 1, 196, 128>}]} {
    %c0 = arith.constant 0 : index
    %c0_0 = arith.constant 0 : index
    %c0_1 = arith.constant 0 : index
    %0 = vector.load %arg3[%c0, %c0_0, %c0_1] : memref<1x196x256xbf16, #tpu.memory_space<vmem>>, vector<1x196x256xbf16>
    %1 = vector.shape_cast %0 : vector<1x196x256xbf16> to vector<196x256xbf16>
    %c0_2 = arith.constant 0 : index
    %c0_3 = arith.constant 0 : index
    %c0_4 = arith.constant 0 : index
    %2 = vector.load %arg4[%c0_2, %c0_3, %c0_4] : memref<1x256x128xbf16, #tpu.memory_space<vmem>>, vector<1x256x128xbf16>
    %3 = vector.shape_cast %2 : vector<1x256x128xbf16> to vector<256x128xbf16>
    %cst = arith.constant dense<0.000000e+00> : vector<196x128xf32>
    %4 = tpu.matmul %1, %3, %cst {dimension_numbers = #tpu.dot_dimension_numbers<[1], [0], [0], [1], [0, 0, 1, 1], [], []>} : vector<196x256xbf16>, vector<256x128xbf16>, vector<196x128xf32> -> vector<196x128xf32>
    %c0_5 = arith.constant 0 : index
    %c0_6 = arith.constant 0 : index
    %c0_7 = arith.constant 0 : index
    %5 = vector.load %arg5[%c0_5, %c0_6, %c0_7] : memref<1x196x128xf32, #tpu.memory_space<vmem>>, vector<1x196x128xf32>
    %6 = vector.shape_cast %5 : vector<1x196x128xf32> to vector<196x128xf32>
    %7 = vector.shape_cast %4 : vector<196x128xf32> to vector<1x196x128xf32>
    tpu.vector_store %arg5[%c0_5, %c0_6, %c0_7], %7 {strides = array<i32>} : memref<1x196x128xf32, #tpu.memory_space<vmem>>, vector<1x196x128xf32>,
    return
  }
  func.func @transform_0(%arg0: i32, %arg1: i32, %arg2: memref<3xi32, #tpu.memory_space<smem>>) -> (i32, i32, i32) {
    %c0_i32 = arith.constant 0 : i32
    %c0_i32_0 = arith.constant 0 : i32
    %c0_i32_1 = arith.constant 0 : i32
    return %arg1, %c0_i32, %c0_i32_0 : i32, i32, i32
  }
  func.func @transform_1(%arg0: i32, %arg1: i32, %arg2: memref<3xi32, #tpu.memory_space<smem>>) -> (i32, i32, i32) {
    %0 = arith.index_cast %arg1 : i32 to index
    %1 = memref.load %arg2[%0] : memref<3xi32, #tpu.memory_space<smem>>
    %c0_i32 = arith.constant 0 : i32
    %c0_i32_0 = arith.constant 0 : i32
    return %1, %c0_i32, %arg0 : i32, i32, i32
  }
  func.func @transform_2(%arg0: i32, %arg1: i32, %arg2: memref<3xi32, #tpu.memory_space<smem>>) -> (i32, i32, i32) {
    %c0_i32 = arith.constant 0 : i32
    %c0_i32_0 = arith.constant 0 : i32
    return %arg1, %c0_i32, %arg0 : i32, i32, i32
  }
}

</mosaic_0001>

<llo_original>
// kernel: tpu_custom_call.1
$region0: #{tpu_custom_call.1}
  #allocation0 [shape = 'u32[]', space=smem, size = 0x4, offset = 0x4, fixed_abs, tag = 'smem constant byte address 0x4 - core index']
  #allocation1 [shape = 'u32[72,128]{1,0:T(1,128)}', space=vmem, size = 0x9000, scoped, tag = 'internal scratch']
  #allocation2 [shape = 's32[1]{0}', space=sflag, size = 0x4, scoped, tag = 'scoped memory for tpu_custom_call.1']
  #allocation3 [shape = 'u8[512]{0}', space=smem, size = 0x200, scoped, tag = 'prefetched SMEM operand 0']
  %s0 = inlined_call_operand.hbm [shape: s32[3], index: 0, kind: input, shape index: {}]
  %s1 = inlined_call_operand.hbm [shape: bf16[3,196,256], index: 1, kind: input, shape index: {}]
  %s2 = inlined_call_operand.hbm [shape: bf16[2,256,128], index: 2, kind: input, shape index: {}]
  %s3 = inlined_call_operand.hbm [shape: f32[3,196,128], index: 3, kind: output, shape index: {}]
  %s4 = sld [smem:[#allocation0]]
  $region49: #{tpu_custom_call.1} parent=0
    _
  %s6 = ssub.s32 1, %s4
  %s7 = scalar_select 0, %s6, %s4
  %s9 = sshll.u32 %s0, 4
  %s10 = int_to_ptr.hbm [resolvable:$true] %s9
  %12 = dma.hbm_to_smem %s10, 16, [#allocation3], [#allocation2]
  %14 = dma.done [#allocation2], 16
  %15 = sfence
  $region1: #{tpu_custom_call.1} parent=0
    #allocation4 [shape = 'u8[204800]{0}', space=vmem, size = 0x32000, scoped, tag = 'input window, operand 1']
    #allocation5 [shape = 's32[2]{0}', space=sflag, size = 0x8, scoped, tag = 'scoped memory for tpu_custom_call.1']
    #allocation6 [shape = 's32[2]{0}', space=sflag, size = 0x8, scoped, tag = 'scoped memory for tpu_custom_call.1']
    #allocation7 [shape = 'u8[131072]{0}', space=vmem, size = 0x20000, scoped, tag = 'input window, operand 2']
    #allocation8 [shape = 's32[2]{0}', space=sflag, size = 0x8, scoped, tag = 'scoped memory for tpu_custom_call.1']
    #allocation9 [shape = 'u8[204800]{0}', space=vmem, size = 0x32000, scoped, tag = 'output window, operand 0']
    %16 = vsyncpa [#allocation5], 0
    %s17 = scalar_lea.sflag [#allocation5], 1
    %18 = vsyncpa %s17, 0
    %19 = vsyncpa [#allocation8], 0
    %s20 = scalar_lea.sflag [#allocation8], 1
    %21 = vsyncpa %s20, 0
    %22 = vsyncpa [#allocation6], 0
    %s23 = scalar_lea.sflag [#allocation6], 1
    %24 = vsyncpa %s23, 0
    loop: start=0, step=1, limit=5
    $region2: #{tpu_custom_call.1} parent=1 // loop_pre_header
      _
    $region3: #{tpu_custom_call.1} parent=1 // loop_header
      %s26 = sphi 0, %s30
      %p27 = scmp.ge.s32.totalorder %s26, 5
      %s33 = sphi 0, %s45
      %s34 = sphi 0, %s41
      %s35 = sphi 0, %s33
      %s36 = sphi 0, %s34
      %s37 = sphi 0, %s35
      %s38 = sphi 0, %s36
      %s48 = sphi 0, %s50
      %s51 = sphi 0, %s48
      %s52 = sphi 0, %s51
      %s68 = sphi 0, %s52
      %s78 = sphi 0, %s80
      %s81 = sphi 0, %s78
      %s82 = sphi 0, %s81
      %s98 = sphi 0, %s82
      %s106 = sphi 0, %s108
      %s109 = sphi 0, %s106
      %s110 = sphi 0, %s109
      %s126 = sphi 0, %s110
    $region4: #{tpu_custom_call.1} parent=1 // loop_header_branch
      %29 = sbr.rel (%p27) target = $region8
    $region5: #{tpu_custom_call.1} parent=1 // loop_body
      %s31 = ssub.s32 %s26, 1
      %s32 = ssub.s32 %s26, 2
      %s39 = sadd.s32 1, %s34
      %p40 = scmp.ge.s32.totalorder %s39, 3
      %s41 = scalar_select %p40, 0, %s39
      %s42 = sadd.s32 1, %s33
      %s43 = scalar_select %p40, %s42, %s33
      %p44 = scmp.ge.s32.totalorder %s43, 1
      %s45 = scalar_select %p44, 0, %s43
      %s46 = ssub.s32 %s34, %s41
      %p47 = scmp.eq.s32.totalorder %s46, 0
      %s49 = sadd.s32 %s48, 1
      %s50 = scalar_select %p47, %s48, %s49
      %p53 = pneg %p47
      %p54 = scmp.eq.s32.totalorder %s26, 2
      %p55 = por %p53, %p54
      %p56 = scmp.ne.s32.totalorder %s48, %s51
      %p57 = scmp.eq.s32.totalorder %s26, 0
      %p58 = por %p56, %p57
      %p59 = scmp.ne.s32.totalorder %s48, %s51
      %p60 = scmp.eq.s32.totalorder %s31, 2
      %p61 = por %p59, %p60
      %p62 = scmp.ne.s32.totalorder %s51, %s52
      %p63 = scmp.eq.s32.totalorder %s31, 0
      %p64 = por %p62, %p63
      %p65 = scmp.ne.s32.totalorder %s51, %s52
      %p66 = scmp.eq.s32.totalorder %s32, 2
      %p67 = por %p65, %p66
      %p69 = scmp.ne.s32.totalorder %s52, %s68
      %p70 = scmp.eq.s32.totalorder %s32, 0
      %p71 = por %p69, %p70
      %s72 = sld [smem:[#allocation3 + %s34]]
      %s73 = sld [smem:[#allocation3 + %s41]]
      %s74 = ssub.s32 %s72, %s73
      %s75 = ssub.s32 %s33, %s45
      %s76 = sor.u32 %s74, %s75
      %p77 = scmp.eq.s32.totalorder %s76, 0
      %s79 = sadd.s32 %s78, 1
      %s80 = scalar_select %p77, %s78, %s79
      %p83 = pneg %p77
      %p84 = scmp.eq.s32.totalorder %s26, 2
      %p85 = por %p83, %p84
      %p86 = scmp.ne.s32.totalorder %s78, %s81
      %p87 = scmp.eq.s32.totalorder %s26, 0
      %p88 = por %p86, %p87
      %p89 = scmp.ne.s32.totalorder %s78, %s81
      %p90 = scmp.eq.s32.totalorder %s31, 2
      %p91 = por %p89, %p90
      %p92 = scmp.ne.s32.totalorder %s81, %s82
      %p93 = scmp.eq.s32.totalorder %s31, 0
      %p94 = por %p92, %p93
      %p95 = scmp.ne.s32.totalorder %s81, %s82
      %p96 = scmp.eq.s32.totalorder %s32, 2
      %p97 = por %p95, %p96
      %p99 = scmp.ne.s32.totalorder %s82, %s98
      %p100 = scmp.eq.s32.totalorder %s32, 0
      %p101 = por %p99, %p100
      %s102 = ssub.s32 %s34, %s41
      %s103 = ssub.s32 %s33, %s45
      %s104 = sor.u32 %s102, %s103
      %p105 = scmp.eq.s32.totalorder %s104, 0
      %s107 = sadd.s32 %s106, 1
      %s108 = scalar_select %p105, %s106, %s107
      %p111 = pneg %p105
      %p112 = scmp.eq.s32.totalorder %s26, 2
      %p113 = por %p111, %p112
      %p114 = scmp.ne.s32.totalorder %s106, %s109
      %p115 = scmp.eq.s32.totalorder %s26, 0
      %p116 = por %p114, %p115
      %p117 = scmp.ne.s32.totalorder %s106, %s109
      %p118 = scmp.eq.s32.totalorder %s31, 2
      %p119 = por %p117, %p118
      %p120 = scmp.ne.s32.totalorder %s109, %s110
      %p121 = scmp.eq.s32.totalorder %s31, 0
      %p122 = por %p120, %p121
      %p123 = scmp.ne.s32.totalorder %s109, %s110
      %p124 = scmp.eq.s32.totalorder %s32, 2
      %p125 = por %p123, %p124
      %p127 = scmp.ne.s32.totalorder %s110, %s126
      %p128 = scmp.eq.s32.totalorder %s32, 0
      %p129 = por %p127, %p128
      %p130 = scmp.le.s32.totalorder 1, %s26
      %p131 = scmp.lt.s32.totalorder %s26, 4
      %p132 = pnand %p130, %p131
      %p133 = pneg %p132
      // Predicated region
      $region9: #{tpu_custom_call.1} parent=5 // pred_check
        _
      $region10: #{tpu_custom_call.1} parent=5 // pred_check_branch
        %135 = sbr.rel (%p132) target = $region12
      $region11: #{tpu_custom_call.1} parent=5 // pred_region
        %s136 = ssub.s32 %s26, 1
      $region12: #{tpu_custom_call.1} parent=5 // pred_fallthru
        _
      %p137 = scmp.lt.s32.totalorder %s26, 3
      // Predicated region
      $region13: #{tpu_custom_call.1} parent=5 // pred_check
        %p138 = pneg %p137
      $region14: #{tpu_custom_call.1} parent=5 // pred_check_branch
        %140 = sbr.rel (%p138) target = $region16
      $region15: #{tpu_custom_call.1} parent=5 // pred_region
        // Predicated region
        $region17: #{tpu_custom_call.1} parent=15 // pred_check
          %p141 = pneg %p58
        $region18: #{tpu_custom_call.1} parent=15 // pred_check_branch
          %143 = sbr.rel (%p141) target = $region20
        $region19: #{tpu_custom_call.1} parent=15 // pred_region
          %s144 = sand.u32 %s48, 1
          %s145 = scalar_lea.sflag [#allocation5], %s144
          %s146 = sand.u32 %s48, 1
          %s147 = smul.addr %s146, 200
          %s148 = scalar_lea.vmem [#allocation4], %s147
          %150 = vsyncadd %s145, 0
          %s151 = smul.addr %s34, 50
          %s152 = smul.addr %s151, 4
          %s153 = scalar_lea.hbm %s1, %s152
          %s154 = sshll.u32 %s153, 4
          %s155 = int_to_ptr.hbm [resolvable:$true] %s154
          %s156 = sshll.u32 %s148, 4
          %s157 = int_to_ptr.vmem [resolvable:$true] %s156
          %162 = dma.hbm_to_vmem [thread:$0]  %s155, 3200, %s157, %s145, 128, 128, 8
        $region20: #{tpu_custom_call.1} parent=15 // pred_fallthru
          _
        // Predicated region
        $region21: #{tpu_custom_call.1} parent=15 // pred_check
          %p163 = pneg %p88
        $region22: #{tpu_custom_call.1} parent=15 // pred_check_branch
          %165 = sbr.rel (%p163) target = $region24
        $region23: #{tpu_custom_call.1} parent=15 // pred_region
          %s166 = sand.u32 %s78, 1
          %s167 = scalar_lea.sflag [#allocation8], %s166
          %s168 = sand.u32 %s78, 1
          %s169 = smul.addr %s168, 128
          %s170 = scalar_lea.vmem [#allocation7], %s169
          %s171 = sld [smem:[#allocation3 + %s34]]
          %173 = vsyncadd %s167, 0
          %s174 = smul.addr %s171, 32
          %s175 = sadd.s32 %s33, %s174
          %s176 = smul.addr %s175, 4
          %s177 = scalar_lea.hbm %s2, %s176
          %s178 = sshll.u32 %s177, 4
          %s179 = int_to_ptr.hbm [resolvable:$true] %s178
          %s180 = sshll.u32 %s170, 4
          %s181 = int_to_ptr.vmem [resolvable:$true] %s180
          %186 = dma.hbm_to_vmem [thread:$0]  %s179, 2048, %s181, %s167, 64, 64, 4
        $region24: #{tpu_custom_call.1} parent=15 // pred_fallthru
          _
      $region16: #{tpu_custom_call.1} parent=5 // pred_fallthru
        _
      %p187 = scmp.le.s32.totalorder 1, %s26
      %p188 = scmp.lt.s32.totalorder %s26, 4
      %p189 = pnand %p187, %p188
      %p190 = pneg %p189
      // Predicated region
      $region25: #{tpu_custom_call.1} parent=5 // pred_check
        _
      $region26: #{tpu_custom_call.1} parent=5 // pred_check_branch
        %192 = sbr.rel (%p189) target = $region28
      $region27: #{tpu_custom_call.1} parent=5 // pred_region
        %s193 = ssub.s32 %s26, 1
        %s194 = sand.u32 %s51, 1
        %s195 = scalar_lea.sflag [#allocation5], %s194
        %s196 = sand.u32 %s51, 1
        %s197 = smul.addr %s196, 200
        %s198 = scalar_lea.vmem [#allocation4], %s197
        // Predicated region
        $region29: #{tpu_custom_call.1} parent=27 // pred_check
          %p199 = pneg %p64
        $region30: #{tpu_custom_call.1} parent=27 // pred_check_branch
          %201 = sbr.rel (%p199) target = $region32
        $region31: #{tpu_custom_call.1} parent=27 // pred_region
          %203 = dma.done %s195, 3200
        $region32: #{tpu_custom_call.1} parent=27 // pred_fallthru
          _
        %s204 = sand.u32 %s81, 1
        %s205 = scalar_lea.sflag [#allocation8], %s204
        %s206 = sand.u32 %s81, 1
        %s207 = smul.addr %s206, 128
        %s208 = scalar_lea.vmem [#allocation7], %s207
        // Predicated region
        $region33: #{tpu_custom_call.1} parent=27 // pred_check
          %p209 = pneg %p94
        $region34: #{tpu_custom_call.1} parent=27 // pred_check_branch
          %211 = sbr.rel (%p209) target = $region36
        $region35: #{tpu_custom_call.1} parent=27 // pred_region
          %213 = dma.done %s205, 2048
        $region36: #{tpu_custom_call.1} parent=27 // pred_fallthru
          _
        %s214 = sand.u32 %s51, 1
        %s215 = scalar_lea.sflag [#allocation5], %s214
        %s216 = sand.u32 %s51, 1
        %s217 = smul.addr %s216, 200
        %s218 = scalar_lea.vmem [#allocation4], %s217
        %p219 = pneg %p64
        %p220 = pneg %p61
        %s221 = sand.u32 %s81, 1
        %s222 = scalar_lea.sflag [#allocation8], %s221
        %s223 = sand.u32 %s81, 1
        %s224 = smul.addr %s223, 128
        %s225 = scalar_lea.vmem [#allocation7], %s224
        %p226 = pneg %p94
        %p227 = pneg %p91
        %p228 = pneg %p122
        %p229 = pneg %p119
        %s230 = sand.u32 %s109, 1
        %s231 = scalar_lea.sflag [#allocation6], %s230
        %s232 = sand.u32 %s109, 1
        %s233 = smul.addr %s232, 200
        %s234 = scalar_lea.vmem [#allocation9], %s233
        %s235 = sld [smem:[#allocation3 + %s36]]
        %v236 = vld [vmem:[%s198] sm:$0xff]
        %v237 = vld [vmem:[%s198 + $0x8] sm:$0xff]
        %v238 = vld [vmem:[%s198 + $0x10] sm:$0xff]
        %v239 = vld [vmem:[%s198 + $0x18] sm:$0xff]
        %v240 = vld [vmem:[%s198 + $0x20] sm:$0xff]
        %v241 = vld [vmem:[%s198 + $0x28] sm:$0xff]
        %v242 = vld [vmem:[%s198 + $0x30] sm:$0xff]
        %v243 = vld [vmem:[%s198 + $0x38] sm:$0xff]
        %v244 = vld [vmem:[%s198 + $0x40] sm:$0xff]
        %v245 = vld [vmem:[%s198 + $0x48] sm:$0xff]
        %v246 = vld [vmem:[%s198 + $0x50] sm:$0xff]
        %v247 = vld [vmem:[%s198 + $0x58] sm:$0xff]
        %v248 = vld [vmem:[%s198 + $0x60] sm:$0xff]
        %v249 = vld [vmem:[%s198 + $0x68] sm:$0xff]
        %v250 = vld [vmem:[%s198 + $0x70] sm:$0xff]
        %v251 = vld [vmem:[%s198 + $0x78] sm:$0xff]
        %v252 = vld [vmem:[%s198 + $0x80] sm:$0xff]
        %v253 = vld [vmem:[%s198 + $0x88] sm:$0xff]
        %v254 = vld [vmem:[%s198 + $0x90] sm:$0xff]
        %v255 = vld [vmem:[%s198 + $0x98] sm:$0xff]
        %v256 = vld [vmem:[%s198 + $0xa0] sm:$0xff]
        %v257 = vld [vmem:[%s198 + $0xa8] sm:$0xff]
        %v258 = vld [vmem:[%s198 + $0xb0] sm:$0xff]
        %v259 = vld [vmem:[%s198 + $0xb8] sm:$0xff]
        %v260 = vld [vmem:[%s198 + $0xc0] sm:$0x33]
        %v261 = vld [vmem:[%s208] sm:$0xf]
        %v262 = vld [vmem:[%s208 + $0x4] sm:$0xf]
        %v263 = vld [vmem:[%s208 + $0x8] sm:$0xf]
        %v264 = vld [vmem:[%s208 + $0xc] sm:$0xf]
        %v265 = vld [vmem:[%s208 + $0x10] sm:$0xf]
        %v266 = vld [vmem:[%s208 + $0x14] sm:$0xf]
        %v267 = vld [vmem:[%s208 + $0x18] sm:$0xf]
        %v268 = vld [vmem:[%s208 + $0x1c] sm:$0xf]
        %v269 = vld [vmem:[%s208 + $0x20] sm:$0xf]
        %v270 = vld [vmem:[%s208 + $0x24] sm:$0xf]
        %v271 = vld [vmem:[%s208 + $0x28] sm:$0xf]
        %v272 = vld [vmem:[%s208 + $0x2c] sm:$0xf]
        %v273 = vld [vmem:[%s208 + $0x30] sm:$0xf]
        %v274 = vld [vmem:[%s208 + $0x34] sm:$0xf]
        %v275 = vld [vmem:[%s208 + $0x38] sm:$0xf]
        %v276 = vld [vmem:[%s208 + $0x3c] sm:$0xf]
        %v277 = vld [vmem:[%s208 + $0x40] sm:$0xf]
        %v278 = vld [vmem:[%s208 + $0x44] sm:$0xf]
        %v279 = vld [vmem:[%s208 + $0x48] sm:$0xf]
        %v280 = vld [vmem:[%s208 + $0x4c] sm:$0xf]
        %v281 = vld [vmem:[%s208 + $0x50] sm:$0xf]
        %v282 = vld [vmem:[%s208 + $0x54] sm:$0xf]
        %v283 = vld [vmem:[%s208 + $0x58] sm:$0xf]
        %v284 = vld [vmem:[%s208 + $0x5c] sm:$0xf]
        %v285 = vld [vmem:[%s208 + $0x60] sm:$0xf]
        %v286 = vld [vmem:[%s208 + $0x64] sm:$0xf]
        %v287 = vld [vmem:[%s208 + $0x68] sm:$0xf]
        %v288 = vld [vmem:[%s208 + $0x6c] sm:$0xf]
        %v289 = vld [vmem:[%s208 + $0x70] sm:$0xf]
        %v290 = vld [vmem:[%s208 + $0x74] sm:$0xf]
        %v291 = vld [vmem:[%s208 + $0x78] sm:$0xf]
        %v292 = vld [vmem:[%s208 + $0x7c] sm:$0xf]
        %v318 = vunpack.c.l.b16 %v236
        %v319 = vunpack.c.h.b16 %v236
        %v320 = vunpack.c.l.b16 %v237
        %v321 = vunpack.c.h.b16 %v237
        %v322 = vunpack.c.l.b16 %v238
        %v323 = vunpack.c.h.b16 %v238
        %v324 = vunpack.c.l.b16 %v239
        %v325 = vunpack.c.h.b16 %v239
        %v326 = vunpack.c.l.b16 %v240
        %v327 = vunpack.c.h.b16 %v240
        %v328 = vunpack.c.l.b16 %v241
        %v329 = vunpack.c.h.b16 %v241
        %v330 = vunpack.c.l.b16 %v242
        %v331 = vunpack.c.h.b16 %v242
        %v332 = vunpack.c.l.b16 %v243
        %v333 = vunpack.c.h.b16 %v243
        %v334 = vunpack.c.l.b16 %v244
        %v335 = vunpack.c.h.b16 %v244
        %v336 = vunpack.c.l.b16 %v245
        %v337 = vunpack.c.h.b16 %v245
        %v338 = vunpack.c.l.b16 %v246
        %v339 = vunpack.c.h.b16 %v246
        %v340 = vunpack.c.l.b16 %v247
        %v341 = vunpack.c.h.b16 %v247
        %v342 = vunpack.c.l.b16 %v248
        %v343 = vunpack.c.h.b16 %v248
        %v344 = vunpack.c.l.b16 %v249
        %v345 = vunpack.c.h.b16 %v249
        %v346 = vunpack.c.l.b16 %v250
        %v347 = vunpack.c.h.b16 %v250
        %v348 = vunpack.c.l.b16 %v251
        %v349 = vunpack.c.h.b16 %v251
        %v350 = vunpack.c.l.b16 %v252
        %v351 = vunpack.c.h.b16 %v252
        %v352 = vunpack.c.l.b16 %v253
        %v353 = vunpack.c.h.b16 %v253
        %v354 = vunpack.c.l.b16 %v254
        %v355 = vunpack.c.h.b16 %v254
        %v356 = vunpack.c.l.b16 %v255
        %v357 = vunpack.c.h.b16 %v255
        %v358 = vunpack.c.l.b16 %v256
        %v359 = vunpack.c.h.b16 %v256
        %v360 = vunpack.c.l.b16 %v257
        %v361 = vunpack.c.h.b16 %v257
        %v362 = vunpack.c.l.b16 %v258
        %v363 = vunpack.c.h.b16 %v258
        %v364 = vunpack.c.l.b16 %v259
        %v365 = vunpack.c.h.b16 %v259
        %v366 = vunpack.c.l.b16 %v260
        %v367 = vunpack.c.h.b16 %v260
        %v368 = vpack.c.b16 %v320, %v318
        %v369 = vpack.c.b16 %v321, %v319
        %v370 = vpack.c.b16 %v324, %v322
        %v371 = vpack.c.b16 %v325, %v323
        %v372 = vpack.c.b16 %v328, %v326
        %v373 = vpack.c.b16 %v329, %v327
        %v374 = vpack.c.b16 %v332, %v330
        %v375 = vpack.c.b16 %v333, %v331
        %v376 = vpack.c.b16 %v336, %v334
        %v377 = vpack.c.b16 %v337, %v335
        %v378 = vpack.c.b16 %v340, %v338
        %v379 = vpack.c.b16 %v341, %v339
        %v380 = vpack.c.b16 %v344, %v342
        %v381 = vpack.c.b16 %v345, %v343
        %v382 = vpack.c.b16 %v348, %v346
        %v383 = vpack.c.b16 %v349, %v347
        %v384 = vpack.c.b16 %v352, %v350
        %v385 = vpack.c.b16 %v353, %v351
        %v386 = vpack.c.b16 %v356, %v354
        %v387 = vpack.c.b16 %v357, %v355
        %v388 = vpack.c.b16 %v360, %v358
        %v389 = vpack.c.b16 %v361, %v359
        %v390 = vpack.c.b16 %v364, %v362
        %v391 = vpack.c.b16 %v365, %v363
        %v392 = vpack.c.b16 %v366, %v366
        %v393 = vpack.c.b16 %v367, %v367
        %v452 = vunpack.c.l.b16 %v261
        %v453 = vunpack.c.l.b16 %v262
        %v454 = vunpack.c.l.b16 %v263
        %v455 = vunpack.c.l.b16 %v264
        %v456 = vunpack.c.l.b16 %v265
        %v457 = vunpack.c.l.b16 %v266
        %v458 = vunpack.c.l.b16 %v267
        %v459 = vunpack.c.l.b16 %v268
        %v460 = vunpack.c.l.b16 %v269
        %v461 = vunpack.c.l.b16 %v270
        %v462 = vunpack.c.l.b16 %v271
        %v463 = vunpack.c.l.b16 %v272
        %v464 = vunpack.c.l.b16 %v273
        %v465 = vunpack.c.l.b16 %v274
        %v466 = vunpack.c.l.b16 %v275
        %v467 = vunpack.c.l.b16 %v276
        %v468 = vunpack.c.l.b16 %v277
        %v469 = vunpack.c.l.b16 %v278
        %v470 = vunpack.c.l.b16 %v279
        %v471 = vunpack.c.l.b16 %v280
        %v472 = vunpack.c.l.b16 %v281
        %v473 = vunpack.c.l.b16 %v282
        %v474 = vunpack.c.l.b16 %v283
        %v475 = vunpack.c.l.b16 %v284
        %v476 = vunpack.c.l.b16 %v285
        %v477 = vunpack.c.l.b16 %v286
        %v478 = vunpack.c.l.b16 %v287
        %v479 = vunpack.c.l.b16 %v288
        %v480 = vunpack.c.l.b16 %v289
        %v481 = vunpack.c.l.b16 %v290
        %v482 = vunpack.c.l.b16 %v291
        %v483 = vunpack.c.l.b16 %v292
        %v484 = vpack.c.b16 %v453, %v452
        %v485 = vpack.c.b16 %v455, %v454
        %v486 = vpack.c.b16 %v457, %v456
        %v487 = vpack.c.b16 %v459, %v458
        %v488 = vpack.c.b16 %v461, %v460
        %v489 = vpack.c.b16 %v463, %v462
        %v490 = vpack.c.b16 %v465, %v464
        %v491 = vpack.c.b16 %v467, %v466
        %v492 = vpack.c.b16 %v469, %v468
        %v493 = vpack.c.b16 %v471, %v470
        %v494 = vpack.c.b16 %v473, %v472
        %v495 = vpack.c.b16 %v475, %v474
        %v496 = vpack.c.b16 %v477, %v476
        %v497 = vpack.c.b16 %v479, %v478
        %v498 = vpack.c.b16 %v481, %v480
        %v499 = vpack.c.b16 %v483, %v482
        %516 = vmatpush.bf16.msra.mxu0 %v491
        %517 = vmatpush.bf16.msra.mxu0 %v490
        %518 = vmatpush.bf16.msra.mxu0 %v489
        %519 = vmatpush.bf16.msra.mxu0 %v488
        %520 = vmatpush.bf16.msra.mxu0 %v487
        %521 = vmatpush.bf16.msra.mxu0 %v486
        %522 = vmatpush.bf16.msra.mxu0 %v485
        %523 = vmatpush.bf16.msra.mxu0 %v484
        %524 = vmatmul.bf16.gmra.mxu0 %v368
        %v525 = vpop.f32.mrf.mxu0
        %v526 = vadd.f32 0.0, %v525
        %v527 = vpop.f32.mrf.mxu0
        %v528 = vadd.f32 0.0, %v527
        %529 = vmatmul.bf16.gmra.mxu0 %v370
        %v530 = vpop.f32.mrf.mxu0
        %v531 = vadd.f32 0.0, %v530
        %v532 = vpop.f32.mrf.mxu0
        %v533 = vadd.f32 0.0, %v532
        %534 = vmatmul.bf16.gmra.mxu0 %v372
        %v535 = vpop.f32.mrf.mxu0
        %v536 = vadd.f32 0.0, %v535
        %v537 = vpop.f32.mrf.mxu0
        %v538 = vadd.f32 0.0, %v537
        %539 = vmatmul.bf16.gmra.mxu0 %v374
        %v540 = vpop.f32.mrf.mxu0
        %v541 = vadd.f32 0.0, %v540
        %v542 = vpop.f32.mrf.mxu0
        %v543 = vadd.f32 0.0, %v542
        %544 = vmatmul.bf16.gmra.mxu0 %v376
        %v545 = vpop.f32.mrf.mxu0
        %v546 = vadd.f32 0.0, %v545
        %v547 = vpop.f32.mrf.mxu0
        %v548 = vadd.f32 0.0, %v547
        %549 = vmatmul.bf16.gmra.mxu0 %v378
        %v550 = vpop.f32.mrf.mxu0
        %v551 = vadd.f32 0.0, %v550
        %v552 = vpop.f32.mrf.mxu0
        %v553 = vadd.f32 0.0, %v552
        %554 = vmatmul.bf16.gmra.mxu0 %v380
        %v555 = vpop.f32.mrf.mxu0
        %v556 = vadd.f32 0.0, %v555
        %v557 = vpop.f32.mrf.mxu0
        %v558 = vadd.f32 0.0, %v557
        %559 = vmatmul.bf16.gmra.mxu0 %v382
        %v560 = vpop.f32.mrf.mxu0
        %v561 = vadd.f32 0.0, %v560
        %v562 = vpop.f32.mrf.mxu0
        %v563 = vadd.f32 0.0, %v562
        %564 = vmatmul.bf16.gmra.mxu0 %v384
        %v565 = vpop.f32.mrf.mxu0
        %v566 = vadd.f32 0.0, %v565
        %v567 = vpop.f32.mrf.mxu0
        %v568 = vadd.f32 0.0, %v567
        %569 = vmatmul.bf16.gmra.mxu0 %v386
        %v570 = vpop.f32.mrf.mxu0
        %v571 = vadd.f32 0.0, %v570
        %v572 = vpop.f32.mrf.mxu0
        %v573 = vadd.f32 0.0, %v572
        %574 = vmatmul.bf16.gmra.mxu0 %v388
        %v575 = vpop.f32.mrf.mxu0
        %v576 = vadd.f32 0.0, %v575
        %v577 = vpop.f32.mrf.mxu0
        %v578 = vadd.f32 0.0, %v577
        %579 = vmatmul.bf16.gmra.mxu0 %v390
        %v580 = vpop.f32.mrf.mxu0
        %v581 = vadd.f32 0.0, %v580
        %v582 = vpop.f32.mrf.mxu0
        %v583 = vadd.f32 0.0, %v582
        %584 = vmatmul.bf16.gmra.mxu0 %v392
        %v585 = vpop.f32.mrf.mxu0
        %v586 = vadd.f32 0.0, %v585
        %v587 = vpop.f32.mrf.mxu0
        %588 = vdwg.mxu0
        %589 = vmatpush.bf16.msra.mxu0 %v499
        %590 = vmatpush.bf16.msra.mxu0 %v498
        %591 = vmatpush.bf16.msra.mxu0 %v497
        %592 = vmatpush.bf16.msra.mxu0 %v496
        %593 = vmatpush.bf16.msra.mxu0 %v495
        %594 = vmatpush.bf16.msra.mxu0 %v494
        %595 = vmatpush.bf16.msra.mxu0 %v493
        %596 = vmatpush.bf16.msra.mxu0 %v492
        %597 = vmatmul.bf16.gmra.mxu0 %v369
        %v598 = vpop.f32.mrf.mxu0
        %v599 = vadd.f32 %v526, %v598
        %v600 = vpop.f32.mrf.mxu0
        %v601 = vadd.f32 %v528, %v600
        %602 = vmatmul.bf16.gmra.mxu0 %v371
        %v603 = vpop.f32.mrf.mxu0
        %v604 = vadd.f32 %v531, %v603
        %v605 = vpop.f32.mrf.mxu0
        %v606 = vadd.f32 %v533, %v605
        %607 = vmatmul.bf16.gmra.mxu0 %v373
        %v608 = vpop.f32.mrf.mxu0
        %v609 = vadd.f32 %v536, %v608
        %v610 = vpop.f32.mrf.mxu0
        %v611 = vadd.f32 %v538, %v610
        %612 = vmatmul.bf16.gmra.mxu0 %v375
        %v613 = vpop.f32.mrf.mxu0
        %v614 = vadd.f32 %v541, %v613
        %v615 = vpop.f32.mrf.mxu0
        %v616 = vadd.f32 %v543, %v615
        %617 = vmatmul.bf16.gmra.mxu0 %v377
        %v618 = vpop.f32.mrf.mxu0
        %v619 = vadd.f32 %v546, %v618
        %v620 = vpop.f32.mrf.mxu0
        %v621 = vadd.f32 %v548, %v620
        %622 = vmatmul.bf16.gmra.mxu0 %v379
        %v623 = vpop.f32.mrf.mxu0
        %v624 = vadd.f32 %v551, %v623
        %v625 = vpop.f32.mrf.mxu0
        %v626 = vadd.f32 %v553, %v625
        %627 = vmatmul.bf16.gmra.mxu0 %v381
        %v628 = vpop.f32.mrf.mxu0
        %v629 = vadd.f32 %v556, %v628
        %v630 = vpop.f32.mrf.mxu0
        %v631 = vadd.f32 %v558, %v630
        %632 = vmatmul.bf16.gmra.mxu0 %v383
        %v633 = vpop.f32.mrf.mxu0
        %v634 = vadd.f32 %v561, %v633
        %v635 = vpop.f32.mrf.mxu0
        %v636 = vadd.f32 %v563, %v635
        %637 = vmatmul.bf16.gmra.mxu0 %v385
        %v638 = vpop.f32.mrf.mxu0
        %v639 = vadd.f32 %v566, %v638
        %v640 = vpop.f32.mrf.mxu0
        %v641 = vadd.f32 %v568, %v640
        %642 = vmatmul.bf16.gmra.mxu0 %v387
        %v643 = vpop.f32.mrf.mxu0
        %v644 = vadd.f32 %v571, %v643
        %v645 = vpop.f32.mrf.mxu0
        %v646 = vadd.f32 %v573, %v645
        %647 = vmatmul.bf16.gmra.mxu0 %v389
        %v648 = vpop.f32.mrf.mxu0
        %v649 = vadd.f32 %v576, %v648
        %v650 = vpop.f32.mrf.mxu0
        %v651 = vadd.f32 %v578, %v650
        %652 = vmatmul.bf16.gmra.mxu0 %v391
        %v653 = vpop.f32.mrf.mxu0
        %v654 = vadd.f32 %v581, %v653
        %v655 = vpop.f32.mrf.mxu0
        %v656 = vadd.f32 %v583, %v655
        %657 = vmatmul.bf16.gmra.mxu0 %v393
        %v658 = vpop.f32.mrf.mxu0
        %v659 = vadd.f32 %v586, %v658
        %v660 = vpop.f32.mrf.mxu0
        %661 = vdwg.mxu0
        %662 = vst [vmem:[%s234] sm:$0xff] %v599
        %663 = vst [vmem:[%s234 + $0x8] sm:$0xff] %v601
        %664 = vst [vmem:[%s234 + $0x10] sm:$0xff] %v604
        %665 = vst [vmem:[%s234 + $0x18] sm:$0xff] %v606
        %666 = vst [vmem:[%s234 + $0x20] sm:$0xff] %v609
        %667 = vst [vmem:[%s234 + $0x28] sm:$0xff] %v611
        %668 = vst [vmem:[%s234 + $0x30] sm:$0xff] %v614
        %669 = vst [vmem:[%s234 + $0x38] sm:$0xff] %v616
        %670 = vst [vmem:[%s234 + $0x40] sm:$0xff] %v619
        %671 = vst [vmem:[%s234 + $0x48] sm:$0xff] %v621
        %672 = vst [vmem:[%s234 + $0x50] sm:$0xff] %v624
        %673 = vst [vmem:[%s234 + $0x58] sm:$0xff] %v626
        %674 = vst [vmem:[%s234 + $0x60] sm:$0xff] %v629
        %675 = vst [vmem:[%s234 + $0x68] sm:$0xff] %v631
        %676 = vst [vmem:[%s234 + $0x70] sm:$0xff] %v634
        %677 = vst [vmem:[%s234 + $0x78] sm:$0xff] %v636
        %678 = vst [vmem:[%s234 + $0x80] sm:$0xff] %v639
        %679 = vst [vmem:[%s234 + $0x88] sm:$0xff] %v641
        %680 = vst [vmem:[%s234 + $0x90] sm:$0xff] %v644
        %681 = vst [vmem:[%s234 + $0x98] sm:$0xff] %v646
        %682 = vst [vmem:[%s234 + $0xa0] sm:$0xff] %v649
        %683 = vst [vmem:[%s234 + $0xa8] sm:$0xff] %v651
        %684 = vst [vmem:[%s234 + $0xb0] sm:$0xff] %v654
        %685 = vst [vmem:[%s234 + $0xb8] sm:$0xff] %v656
        %686 = vst [vmem:[%s234 + $0xc0] sm:$0xf] %v659
        %s687 = sand.u32 %s109, 1
        %s688 = scalar_lea.sflag [#allocation6], %s687
        %s689 = sand.u32 %s109, 1
        %s690 = smul.addr %s689, 200
        %s691 = scalar_lea.vmem [#allocation9], %s690
        // Predicated region
        $region37: #{tpu_custom_call.1} parent=27 // pred_check
          %p692 = pneg %p119
        $region38: #{tpu_custom_call.1} parent=27 // pred_check_branch
          %694 = sbr.rel (%p692) target = $region40
        $region39: #{tpu_custom_call.1} parent=27 // pred_region
          %696 = vsyncadd %s688, 0
          %s697 = smul.addr %s36, 25
          %s698 = sadd.s32 %s35, %s697
          %s699 = smul.addr %s698, 8
          %s700 = scalar_lea.hbm %s3, %s699
          %s701 = sshll.u32 %s691, 4
          %s702 = int_to_ptr.vmem [resolvable:$true] %s701
          %s703 = sshll.u32 %s700, 4
          %s704 = int_to_ptr.hbm [resolvable:$true] %s703
          %709 = dma.vmem_to_hbm [thread:$0]  %s702, 3200, %s704, %s688, 128, 128, 8
        $region40: #{tpu_custom_call.1} parent=27 // pred_fallthru
          _
      $region28: #{tpu_custom_call.1} parent=5 // pred_fallthru
        _
      %p710 = scmp.le.s32.totalorder 2, %s26
      // Predicated region
      $region41: #{tpu_custom_call.1} parent=5 // pred_check
        %p711 = pneg %p710
      $region42: #{tpu_custom_call.1} parent=5 // pred_check_branch
        %713 = sbr.rel (%p711) target = $region44
      $region43: #{tpu_custom_call.1} parent=5 // pred_region
        %s714 = ssub.s32 %s26, 2
        // Predicated region
        $region45: #{tpu_custom_call.1} parent=43 // pred_check
          %p715 = pneg %p125
        $region46: #{tpu_custom_call.1} parent=43 // pred_check_branch
          %717 = sbr.rel (%p715) target = $region48
        $region47: #{tpu_custom_call.1} parent=43 // pred_region
          %s718 = sand.u32 %s110, 1
          %s719 = scalar_lea.sflag [#allocation6], %s718
          %s720 = sand.u32 %s110, 1
          %s721 = smul.addr %s720, 200
          %s722 = scalar_lea.vmem [#allocation9], %s721
          %724 = dma.done %s719, 3200
        $region48: #{tpu_custom_call.1} parent=43 // pred_fallthru
          _
      $region44: #{tpu_custom_call.1} parent=5 // pred_fallthru
        _
    $region6: #{tpu_custom_call.1} parent=1 // loop_footer
      %s30 = sadd.s32 1, %s26
    $region7: #{tpu_custom_call.1} parent=1 // loop_footer_branch
      %25 = sbr.rel target = $region3
    $region8: #{tpu_custom_call.1} parent=1 // loop_exit
      _
    %725 = vsyncpa [#allocation5], 1
    %s726 = scalar_lea.sflag [#allocation5], 1
    %727 = vsyncpa %s726, 1
    %728 = vsyncpa [#allocation8], 1
    %s729 = scalar_lea.sflag [#allocation8], 1
    %730 = vsyncpa %s729, 1
    %731 = vsyncpa [#allocation6], 1
    %s732 = scalar_lea.sflag [#allocation6], 1
    %733 = vsyncpa %s732, 1

</llo_original>
